<compile_context>
chip_gen: v5e
topology: v5e:2x2
jax: 0.10.0
libtpu: 0.0.40
codegen_flags: <defaults>
</compile_context>

<pallas_src>
import jax
import jax.numpy as jnp
from jax.experimental import pallas as pl
from jax.experimental.pallas import tpu as pltpu

EMBEDDING_VECTOR_SIZE = 7
IN_DIM = EMBEDDING_VECTOR_SIZE + 1   # 8
HID = 256
BN_EPS = 1e-5

# Row indices of the packed (8, HID) small-parameter slab.
_G1, _BE1, _G2, _BE2, _G3, _BE3, _W4, _B4 = range(8)


def mlp_bn_kernel(x_ref, w1_ref, w2_ref, w3_ref, p_ref, o_ref):
    def bn_relu(z, g, be):
        # Training-mode BatchNorm1d (biased batch variance), fused into a
        # single scale+shift elementwise pass over z.
        mu = jnp.mean(z, axis=0, keepdims=True)
        d = z - mu
        var = jnp.mean(d * d, axis=0, keepdims=True)
        s = g * jax.lax.rsqrt(var + BN_EPS)      # EUP
        t = be - mu * s
        return jnp.maximum(z * s + t, 0.0)

    # Layer 1 (8 -> 256). Linear bias omitted: absorbed exactly by BN.
    z = jnp.dot(x_ref[...], w1_ref[...], preferred_element_type=jnp.float32)
    h = bn_relu(z, p_ref[_G1:_G1 + 1, :], p_ref[_BE1:_BE1 + 1, :])

    # Layer 2 (256 -> 256), bf16 x bf16 -> f32 on the MXU.
    z = jnp.dot(h.astype(jnp.bfloat16), w2_ref[...],
                preferred_element_type=jnp.float32)
    h = bn_relu(z, p_ref[_G2:_G2 + 1, :], p_ref[_BE2:_BE2 + 1, :])

    # Layer 3 (256 -> 256).
    z = jnp.dot(h.astype(jnp.bfloat16), w3_ref[...],
                preferred_element_type=jnp.float32)
    h = bn_relu(z, p_ref[_G3:_G3 + 1, :], p_ref[_BE3:_BE3 + 1, :])

    # Final 256 -> 1 projection: VPU multiply + lane reduce.
    w4_row = p_ref[_W4:_W4 + 1, :]
    b4 = p_ref[_B4:_B4 + 1, :][:, :1]
    o_ref[...] = jnp.sum(h * w4_row, axis=-1, keepdims=True) + b4


def prepare_params(params):
    """One-time (init-time) weight preparation for the kernel.

    Casts the two 256x256 weights to bf16 and packs the seven tiny per-feature
    vectors into a single (8, 256) slab so one DMA carries them. Keeping this
    out of net_forward removes ~0.75 MiB of per-call wrapper-side HBM traffic.
    """
    packed = jnp.concatenate(
        [
            params["g1"], params["be1"],
            params["g2"], params["be2"],
            params["g3"], params["be3"],
            params["w4"].reshape(1, HID),                         # 256->1 weight as a row
            jnp.full((1, HID), params["b4"][0, 0], jnp.float32),  # final bias, broadcast
        ],
        axis=0,
    )
    return {
        "w1": params["w1"],                        # (8, 256) f32 (tiny)
        "w2": params["w2"].astype(jnp.bfloat16),   # halve weight HBM traffic
        "w3": params["w3"].astype(jnp.bfloat16),
        "packed": packed,
    }


@jax.jit
def net_forward(x, prepared):
    """x: (N, 8) f32 -> (N, 1) f32.  prepared: output of prepare_params()."""
    n = x.shape[0]
    vmem = pl.BlockSpec(memory_space=pltpu.MemorySpace.VMEM)
    return pl.pallas_call(
        mlp_bn_kernel,
        out_shape=jax.ShapeDtypeStruct((n, 1), jnp.float32),
        in_specs=[vmem] * 5,
        out_specs=vmem,
    )(x, prepared["w1"], prepared["w2"], prepared["w3"], prepared["packed"])
    # TODO(synk): if the batch is ever scaled up, tile only the batch axis
    # (grid=(N//TM,), weights pinned to block (0,0) so they stay VMEM-resident,
    # x/out tiled (TM,·)) with a two-pass BN (stats accumulation over an
    # "arbitrary" batch axis into VMEM scratch, then a normalize pass), mark
    # the batch axis "parallel" for the second v7x TensorCore with a
    # cross-core stats reduction, use TM>=256 so the MXU isn't fill/drain
    # bound, make the output lane-dense (shape (N,) / padded slab instead of
    # an (N,1) column), and set vmem_limit_bytes for v7x's 64 MiB VMEM.


def init_params(key):
    """Deterministic parameter init mirroring the PyTorch module's shapes.
    Linear weights stored as (in, out) so the kernel computes x @ W (+ b)."""
    ks = jax.random.split(key, 8)
    dims = [(IN_DIM, HID), (HID, HID), (HID, HID), (HID, 1)]
    params = {}
    for i, (fan_in, fan_out) in enumerate(dims, start=1):
        bound = 1.0 / jnp.sqrt(jnp.float32(fan_in))
        params[f"w{i}"] = jax.random.uniform(
            ks[2 * (i - 1)], (fan_in, fan_out), jnp.float32, -bound, bound)
        params[f"b{i}"] = jax.random.uniform(
            ks[2 * (i - 1) + 1], (1, fan_out), jnp.float32, -bound, bound)
    # BatchNorm1d affine params: gamma = 1, beta = 0 (PyTorch default init)
    for i in range(1, 4):
        params[f"g{i}"] = jnp.ones((1, HID), jnp.float32)
        params[f"be{i}"] = jnp.zeros((1, HID), jnp.float32)
    return params


def reference_forward(x, params):
    """Pure-JAX f32 reference matching the PyTorch module (training-mode BN),
    including the layer-1..3 Linear biases that the kernel legally drops."""
    h = x
    for i in range(1, 4):
        z = h @ params[f"w{i}"] + params[f"b{i}"]
        mu = jnp.mean(z, axis=0, keepdims=True)
        var = jnp.mean((z - mu) ** 2, axis=0, keepdims=True)
        zn = (z - mu) / jnp.sqrt(var + BN_EPS)
        h = jnp.maximum(zn * params[f"g{i}"] + params[f"be{i}"], 0.0)
    return h @ params["w4"] + params["b4"]


if __name__ == "__main__":
    key = jax.random.PRNGKey(0)
    k_x, k_p = jax.random.split(key)

    N = 8
    x = jax.random.normal(k_x, (N, IN_DIM), jnp.float32)
    params = init_params(k_p)

    # One-time weight preparation (hoisted out of the per-call hot path).
    prepared = jax.tree_util.tree_map(jax.device_put, prepare_params(params))
    prepared = jax.block_until_ready(prepared)

    out = net_forward(x, prepared)
    out = jax.block_until_ready(out)

    ref = reference_forward(x, params)
    assert out.shape == (N, 1)
    # Tolerance loosened for bf16 weight/activation matmuls in layers 2-3.
    assert jnp.allclose(out, ref, atol=5e-2, rtol=5e-2), "mismatch vs reference"

    print("KERNEL_OK")
</pallas_src>

<mosaic_0001>
module attributes {stable_mosaic.version = 11 : i64} {
  func.func @mlp_bn_kernel(%arg0: memref<8x8xf32, #tpu.memory_space<vmem>>, %arg1: memref<8x256xf32, #tpu.memory_space<vmem>>, %arg2: memref<256x256xbf16, #tpu.memory_space<vmem>>, %arg3: memref<256x256xbf16, #tpu.memory_space<vmem>>, %arg4: memref<8x256xf32, #tpu.memory_space<vmem>>, %arg5: memref<8x1xf32, #tpu.memory_space<vmem>>) attributes {dimension_semantics = [], scalar_prefetch = 0 : i64, scratch_operands = 0 : i64, tpu.core_type = #tpu.core_type<tc>} {
    %c0 = arith.constant 0 : index
    %c0_0 = arith.constant 0 : index
    %0 = vector.load %arg0[%c0, %c0_0] : memref<8x8xf32, #tpu.memory_space<vmem>>, vector<8x8xf32>
    %c0_1 = arith.constant 0 : index
    %c0_2 = arith.constant 0 : index
    %1 = vector.load %arg1[%c0_1, %c0_2] : memref<8x256xf32, #tpu.memory_space<vmem>>, vector<8x256xf32>
    %cst = arith.constant dense<0.000000e+00> : vector<8x256xf32>
    %2 = tpu.matmul %0, %1, %cst {dimension_numbers = #tpu.dot_dimension_numbers<[1], [0], [0], [1], [0, 0, 1, 1], [], []>} : vector<8x8xf32>, vector<8x256xf32>, vector<8x256xf32> -> vector<8x256xf32>
    %c0_3 = arith.constant 0 : index
    %c0_4 = arith.constant 0 : index
    %3 = vector.load %arg4[%c0_3, %c0_4] : memref<8x256xf32, #tpu.memory_space<vmem>>, vector<1x256xf32>
    %c1 = arith.constant 1 : index
    %c0_5 = arith.constant 0 : index
    %4 = vector.load %arg4[%c1, %c0_5] : memref<8x256xf32, #tpu.memory_space<vmem>>, vector<1x256xf32>
    %cst_6 = arith.constant dense<0.000000e+00> : vector<256xf32>
    %5 = vector.multi_reduction <add>, %2, %cst_6 [0] : vector<8x256xf32> to vector<256xf32>
    %6 = vector.shape_cast %5 : vector<256xf32> to vector<1x256xf32>
    %cst_7 = arith.constant 8.000000e+00 : f32
    %7 = vector.broadcast %cst_7 : f32 to vector<1x256xf32>
    %8 = arith.divf %6, %7 : vector<1x256xf32>
    %9 = vector.broadcast %8 : vector<1x256xf32> to vector<8x256xf32>
    %10 = arith.subf %2, %9 : vector<8x256xf32>
    %11 = arith.mulf %10, %10 : vector<8x256xf32>
    %cst_8 = arith.constant dense<0.000000e+00> : vector<256xf32>
    %12 = vector.multi_reduction <add>, %11, %cst_8 [0] : vector<8x256xf32> to vector<256xf32>
    %13 = vector.shape_cast %12 : vector<256xf32> to vector<1x256xf32>
    %cst_9 = arith.constant 8.000000e+00 : f32
    %14 = vector.broadcast %cst_9 : f32 to vector<1x256xf32>
    %15 = arith.divf %13, %14 : vector<1x256xf32>
    %cst_10 = arith.constant 9.99999974E-6 : f32
    %16 = vector.broadcast %cst_10 : f32 to vector<1x256xf32>
    %17 = arith.addf %15, %16 : vector<1x256xf32>
    %18 = math.rsqrt %17 : vector<1x256xf32>
    %19 = arith.mulf %3, %18 : vector<1x256xf32>
    %20 = arith.mulf %8, %19 : vector<1x256xf32>
    %21 = arith.subf %4, %20 : vector<1x256xf32>
    %22 = vector.broadcast %19 : vector<1x256xf32> to vector<8x256xf32>
    %23 = arith.mulf %2, %22 : vector<8x256xf32>
    %24 = vector.broadcast %21 : vector<1x256xf32> to vector<8x256xf32>
    %25 = arith.addf %23, %24 : vector<8x256xf32>
    %cst_11 = arith.constant 0.000000e+00 : f32
    %26 = vector.broadcast %cst_11 : f32 to vector<8x256xf32>
    %27 = arith.maximumf %25, %26 : vector<8x256xf32>
    %28 = arith.truncf %27 : vector<8x256xf32> to vector<8x256xbf16>
    %c0_12 = arith.constant 0 : index
    %c0_13 = arith.constant 0 : index
    %29 = vector.load %arg2[%c0_12, %c0_13] : memref<256x256xbf16, #tpu.memory_space<vmem>>, vector<256x256xbf16>
    %cst_14 = arith.constant dense<0.000000e+00> : vector<8x256xf32>
    %30 = tpu.matmul %28, %29, %cst_14 {dimension_numbers = #tpu.dot_dimension_numbers<[1], [0], [0], [1], [0, 0, 1, 1], [], []>} : vector<8x256xbf16>, vector<256x256xbf16>, vector<8x256xf32> -> vector<8x256xf32>
    %c2 = arith.constant 2 : index
    %c0_15 = arith.constant 0 : index
    %31 = vector.load %arg4[%c2, %c0_15] : memref<8x256xf32, #tpu.memory_space<vmem>>, vector<1x256xf32>
    %c3 = arith.constant 3 : index
    %c0_16 = arith.constant 0 : index
    %32 = vector.load %arg4[%c3, %c0_16] : memref<8x256xf32, #tpu.memory_space<vmem>>, vector<1x256xf32>
    %cst_17 = arith.constant dense<0.000000e+00> : vector<256xf32>
    %33 = vector.multi_reduction <add>, %30, %cst_17 [0] : vector<8x256xf32> to vector<256xf32>
    %34 = vector.shape_cast %33 : vector<256xf32> to vector<1x256xf32>
    %cst_18 = arith.constant 8.000000e+00 : f32
    %35 = vector.broadcast %cst_18 : f32 to vector<1x256xf32>
    %36 = arith.divf %34, %35 : vector<1x256xf32>
    %37 = vector.broadcast %36 : vector<1x256xf32> to vector<8x256xf32>
    %38 = arith.subf %30, %37 : vector<8x256xf32>
    %39 = arith.mulf %38, %38 : vector<8x256xf32>
    %cst_19 = arith.constant dense<0.000000e+00> : vector<256xf32>
    %40 = vector.multi_reduction <add>, %39, %cst_19 [0] : vector<8x256xf32> to vector<256xf32>
    %41 = vector.shape_cast %40 : vector<256xf32> to vector<1x256xf32>
    %cst_20 = arith.constant 8.000000e+00 : f32
    %42 = vector.broadcast %cst_20 : f32 to vector<1x256xf32>
    %43 = arith.divf %41, %42 : vector<1x256xf32>
    %cst_21 = arith.constant 9.99999974E-6 : f32
    %44 = vector.broadcast %cst_21 : f32 to vector<1x256xf32>
    %45 = arith.addf %43, %44 : vector<1x256xf32>
    %46 = math.rsqrt %45 : vector<1x256xf32>
    %47 = arith.mulf %31, %46 : vector<1x256xf32>
    %48 = arith.mulf %36, %47 : vector<1x256xf32>
    %49 = arith.subf %32, %48 : vector<1x256xf32>
    %50 = vector.broadcast %47 : vector<1x256xf32> to vector<8x256xf32>
    %51 = arith.mulf %30, %50 : vector<8x256xf32>
    %52 = vector.broadcast %49 : vector<1x256xf32> to vector<8x256xf32>
    %53 = arith.addf %51, %52 : vector<8x256xf32>
    %cst_22 = arith.constant 0.000000e+00 : f32
    %54 = vector.broadcast %cst_22 : f32 to vector<8x256xf32>
    %55 = arith.maximumf %53, %54 : vector<8x256xf32>
    %56 = arith.truncf %55 : vector<8x256xf32> to vector<8x256xbf16>
    %c0_23 = arith.constant 0 : index
    %c0_24 = arith.constant 0 : index
    %57 = vector.load %arg3[%c0_23, %c0_24] : memref<256x256xbf16, #tpu.memory_space<vmem>>, vector<256x256xbf16>
    %cst_25 = arith.constant dense<0.000000e+00> : vector<8x256xf32>
    %58 = tpu.matmul %56, %57, %cst_25 {dimension_numbers = #tpu.dot_dimension_numbers<[1], [0], [0], [1], [0, 0, 1, 1], [], []>} : vector<8x256xbf16>, vector<256x256xbf16>, vector<8x256xf32> -> vector<8x256xf32>
    %c4 = arith.constant 4 : index
    %c0_26 = arith.constant 0 : index
    %59 = vector.load %arg4[%c4, %c0_26] : memref<8x256xf32, #tpu.memory_space<vmem>>, vector<1x256xf32>
    %c5 = arith.constant 5 : index
    %c0_27 = arith.constant 0 : index
    %60 = vector.load %arg4[%c5, %c0_27] : memref<8x256xf32, #tpu.memory_space<vmem>>, vector<1x256xf32>
    %cst_28 = arith.constant dense<0.000000e+00> : vector<256xf32>
    %61 = vector.multi_reduction <add>, %58, %cst_28 [0] : vector<8x256xf32> to vector<256xf32>
    %62 = vector.shape_cast %61 : vector<256xf32> to vector<1x256xf32>
    %cst_29 = arith.constant 8.000000e+00 : f32
    %63 = vector.broadcast %cst_29 : f32 to vector<1x256xf32>
    %64 = arith.divf %62, %63 : vector<1x256xf32>
    %65 = vector.broadcast %64 : vector<1x256xf32> to vector<8x256xf32>
    %66 = arith.subf %58, %65 : vector<8x256xf32>
    %67 = arith.mulf %66, %66 : vector<8x256xf32>
    %cst_30 = arith.constant dense<0.000000e+00> : vector<256xf32>
    %68 = vector.multi_reduction <add>, %67, %cst_30 [0] : vector<8x256xf32> to vector<256xf32>
    %69 = vector.shape_cast %68 : vector<256xf32> to vector<1x256xf32>
    %cst_31 = arith.constant 8.000000e+00 : f32
    %70 = vector.broadcast %cst_31 : f32 to vector<1x256xf32>
    %71 = arith.divf %69, %70 : vector<1x256xf32>
    %cst_32 = arith.constant 9.99999974E-6 : f32
    %72 = vector.broadcast %cst_32 : f32 to vector<1x256xf32>
    %73 = arith.addf %71, %72 : vector<1x256xf32>
    %74 = math.rsqrt %73 : vector<1x256xf32>
    %75 = arith.mulf %59, %74 : vector<1x256xf32>
    %76 = arith.mulf %64, %75 : vector<1x256xf32>
    %77 = arith.subf %60, %76 : vector<1x256xf32>
    %78 = vector.broadcast %75 : vector<1x256xf32> to vector<8x256xf32>
    %79 = arith.mulf %58, %78 : vector<8x256xf32>
    %80 = vector.broadcast %77 : vector<1x256xf32> to vector<8x256xf32>
    %81 = arith.addf %79, %80 : vector<8x256xf32>
    %cst_33 = arith.constant 0.000000e+00 : f32
    %82 = vector.broadcast %cst_33 : f32 to vector<8x256xf32>
    %83 = arith.maximumf %81, %82 : vector<8x256xf32>
    %c6 = arith.constant 6 : index
    %c0_34 = arith.constant 0 : index
    %84 = vector.load %arg4[%c6, %c0_34] : memref<8x256xf32, #tpu.memory_space<vmem>>, vector<1x256xf32>
    %c7 = arith.constant 7 : index
    %c0_35 = arith.constant 0 : index
    %85 = vector.load %arg4[%c7, %c0_35] : memref<8x256xf32, #tpu.memory_space<vmem>>, vector<1x256xf32>
    %86 = vector.extract_strided_slice %85 {offsets = [0, 0], sizes = [1, 1], strides = [1, 1]} : vector<1x256xf32> to vector<1x1xf32>
    %87 = vector.broadcast %84 : vector<1x256xf32> to vector<8x256xf32>
    %88 = arith.mulf %83, %87 : vector<8x256xf32>
    %cst_36 = arith.constant dense<0.000000e+00> : vector<8xf32>
    %89 = vector.multi_reduction <add>, %88, %cst_36 [1] : vector<8x256xf32> to vector<8xf32>
    %90 = vector.shape_cast %89 : vector<8xf32> to vector<8x1xf32>
    %91 = vector.broadcast %86 : vector<1x1xf32> to vector<8x1xf32>
    %92 = arith.addf %90, %91 : vector<8x1xf32>
    %c0_37 = arith.constant 0 : index
    %c0_38 = arith.constant 0 : index
    %93 = vector.load %arg5[%c0_37, %c0_38] : memref<8x1xf32, #tpu.memory_space<vmem>>, vector<8x1xf32>
    tpu.vector_store %arg5[%c0_37, %c0_38], %92 {strides = array<i32>} : memref<8x1xf32, #tpu.memory_space<vmem>>, vector<8x1xf32>,
    return
  }
}

</mosaic_0001>

<llo_original>
// kernel: net_forward.1
$region0: #{net_forward.1}
  #allocation0 [shape = 'u32[]', space=smem, size = 0x4, offset = 0x4, fixed_abs, tag = 'smem constant byte address 0x4 - core index']
  #allocation1 [shape = 'u32[72,128]{1,0:T(1,128)}', space=vmem, size = 0x9000, scoped, tag = 'internal scratch']
  %s0 = inlined_call_operand.hbm [shape: f32[8,8], index: 0, kind: input, shape index: {}]
  %s1 = inlined_call_operand.hbm [shape: f32[8,256], index: 1, kind: input, shape index: {}]
  %s2 = inlined_call_operand.hbm [shape: bf16[256,256], index: 2, kind: input, shape index: {}]
  %s3 = inlined_call_operand.hbm [shape: bf16[256,256], index: 3, kind: input, shape index: {}]
  %s4 = inlined_call_operand.hbm [shape: f32[8,256], index: 4, kind: input, shape index: {}]
  %s5 = inlined_call_operand.vmem [shape: f32[8,1], index: 5, kind: output, shape index: {}]
  %s6 = sld [smem:[#allocation0]]
  $region50: #{net_forward.1} parent=0
    _
  %s8 = ssub.s32 1, %s6
  %s9 = scalar_select 0, %s8, %s6
  $region1: #{net_forward.1} parent=0
    #allocation2 [shape = 'u8[4096]{0}', space=vmem, size = 0x1000, scoped, tag = 'input window, operand 0, single buffered']
    #allocation3 [shape = 's32[1]{0}', space=sflag, size = 0x4, scoped, tag = 'scoped memory for net_forward.1']
    #allocation4 [shape = 'u8[8192]{0}', space=vmem, size = 0x2000, scoped, tag = 'input window, operand 1, single buffered']
    #allocation5 [shape = 's32[1]{0}', space=sflag, size = 0x4, scoped, tag = 'scoped memory for net_forward.1']
    #allocation6 [shape = 'u8[131072]{0}', space=vmem, size = 0x20000, scoped, tag = 'input window, operand 2, single buffered']
    #allocation7 [shape = 'u8[131072]{0}', space=vmem, size = 0x20000, scoped, tag = 'input window, operand 3, single buffered']
    #allocation8 [shape = 's32[1]{0}', space=sflag, size = 0x4, scoped, tag = 'scoped memory for net_forward.1']
    #allocation9 [shape = 'u8[8192]{0}', space=vmem, size = 0x2000, scoped, tag = 'input window, operand 4, single buffered']
    %10 = vsyncpa [#allocation3], 0
    %11 = vsyncpa [#allocation5], 0
    %12 = vsyncpa [#allocation8], 0
    // Predicated region
    $region2: #{net_forward.1} parent=1 // pred_check
      _
    $region3: #{net_forward.1} parent=1 // pred_check_branch
      %14 = sbr.rel (0) target = $region5
    $region4: #{net_forward.1} parent=1 // pred_region
      %16 = vsyncadd [#allocation3], 0
      %s18 = sshll.u32 %s0, 4
      %s19 = int_to_ptr.hbm [resolvable:$true] %s18
      %s20 = sshll.u32 [#allocation2], 4
      %s21 = int_to_ptr.vmem [resolvable:$true] %s20
      %23 = dma.hbm_to_vmem [thread:$0]  %s19, 128, %s21, [#allocation3]
    $region5: #{net_forward.1} parent=1 // pred_fallthru
      _
    // Predicated region
    $region6: #{net_forward.1} parent=1 // pred_check
      _
    $region7: #{net_forward.1} parent=1 // pred_check_branch
      %25 = sbr.rel (0) target = $region9
    $region8: #{net_forward.1} parent=1 // pred_region
      %27 = vsyncadd [#allocation5], 0
      %s29 = sshll.u32 %s1, 4
      %s30 = int_to_ptr.hbm [resolvable:$true] %s29
      %s31 = sshll.u32 [#allocation4], 4
      %s32 = int_to_ptr.vmem [resolvable:$true] %s31
      %34 = dma.hbm_to_vmem [thread:$0]  %s30, 256, %s32, [#allocation5]
    $region9: #{net_forward.1} parent=1 // pred_fallthru
      _
    // Predicated region
    $region10: #{net_forward.1} parent=1 // pred_check
      _
    $region11: #{net_forward.1} parent=1 // pred_check_branch
      %36 = sbr.rel (0) target = $region13
    $region12: #{net_forward.1} parent=1 // pred_region
      %38 = vsyncadd [#allocation5], 0
      %s39 = sshll.u32 %s2, 4
      %s40 = int_to_ptr.hbm [resolvable:$true] %s39
      %s41 = sshll.u32 [#allocation6], 4
      %s42 = int_to_ptr.vmem [resolvable:$true] %s41
      %47 = dma.hbm_to_vmem [thread:$0]  %s40, 4096, %s42, [#allocation5], 128, 128, 8
    $region13: #{net_forward.1} parent=1 // pred_fallthru
      _
    // Predicated region
    $region14: #{net_forward.1} parent=1 // pred_check
      _
    $region15: #{net_forward.1} parent=1 // pred_check_branch
      %49 = sbr.rel (0) target = $region17
    $region16: #{net_forward.1} parent=1 // pred_region
      %51 = vsyncadd [#allocation8], 0
      %s52 = sshll.u32 %s3, 4
      %s53 = int_to_ptr.hbm [resolvable:$true] %s52
      %s54 = sshll.u32 [#allocation7], 4
      %s55 = int_to_ptr.vmem [resolvable:$true] %s54
      %60 = dma.hbm_to_vmem [thread:$0]  %s53, 4096, %s55, [#allocation8], 128, 128, 8
    $region17: #{net_forward.1} parent=1 // pred_fallthru
      _
    // Predicated region
    $region18: #{net_forward.1} parent=1 // pred_check
      _
    $region19: #{net_forward.1} parent=1 // pred_check_branch
      %62 = sbr.rel (0) target = $region21
    $region20: #{net_forward.1} parent=1 // pred_region
      %64 = vsyncadd [#allocation8], 0
      %s66 = sshll.u32 %s4, 4
      %s67 = int_to_ptr.hbm [resolvable:$true] %s66
      %s68 = sshll.u32 [#allocation9], 4
      %s69 = int_to_ptr.vmem [resolvable:$true] %s68
      %71 = dma.hbm_to_vmem [thread:$0]  %s67, 256, %s69, [#allocation8]
    $region21: #{net_forward.1} parent=1 // pred_fallthru
      _
    // Predicated region
    $region22: #{net_forward.1} parent=1 // pred_check
      _
    $region23: #{net_forward.1} parent=1 // pred_check_branch
      %73 = sbr.rel (0) target = $region25
    $region24: #{net_forward.1} parent=1 // pred_region
      %75 = dma.done [#allocation3], 128
    $region25: #{net_forward.1} parent=1 // pred_fallthru
      _
    // Predicated region
    $region26: #{net_forward.1} parent=1 // pred_check
      _
    $region27: #{net_forward.1} parent=1 // pred_check_branch
      %77 = sbr.rel (0) target = $region29
    $region28: #{net_forward.1} parent=1 // pred_region
      %79 = dma.done [#allocation5], 256
    $region29: #{net_forward.1} parent=1 // pred_fallthru
      _
    // Predicated region
    $region30: #{net_forward.1} parent=1 // pred_check
      _
    $region31: #{net_forward.1} parent=1 // pred_check_branch
      %81 = sbr.rel (0) target = $region33
    $region32: #{net_forward.1} parent=1 // pred_region
      %83 = dma.done [#allocation5], 4096
    $region33: #{net_forward.1} parent=1 // pred_fallthru
      _
    // Predicated region
    $region34: #{net_forward.1} parent=1 // pred_check
      _
    $region35: #{net_forward.1} parent=1 // pred_check_branch
      %85 = sbr.rel (0) target = $region37
    $region36: #{net_forward.1} parent=1 // pred_region
      %87 = dma.done [#allocation8], 4096
    $region37: #{net_forward.1} parent=1 // pred_fallthru
      _
    // Predicated region
    $region38: #{net_forward.1} parent=1 // pred_check
      _
    $region39: #{net_forward.1} parent=1 // pred_check_branch
      %89 = sbr.rel (0) target = $region41
    $region40: #{net_forward.1} parent=1 // pred_region
      %91 = dma.done [#allocation8], 256
    $region41: #{net_forward.1} parent=1 // pred_fallthru
      _
    %v92 = vld [vmem:[#allocation2] sm:$0xff]
    %v93 = vld [vmem:[#allocation4] sm:$0xff]
    %v94 = vld [vmem:[#allocation4 + $0x8] sm:$0xff]
    %vm95 = vcmask 64512
    %v97 = vsel %vm95, %v92, 0
    %99 = vmatpush.msra.mxu0 0.0
    %100 = vmatpush.msra.mxu0 0.0
    %101 = vmatpush.msra.mxu0 0.0
    %102 = vmatpush.msra.mxu0 0.0
    %103 = vmatpush.msra.mxu0 0.0
    %104 = vmatpush.msra.mxu0 0.0
    %105 = vmatpush.msra.mxu0 0.0
    %106 = vmatpush.msra.mxu0 0.0
    %107 = vmatpush.msra.mxu0 0.0
    %108 = vmatpush.msra.mxu0 0.0
    %109 = vmatpush.msra.mxu0 0.0
    %110 = vmatpush.msra.mxu0 0.0
    %111 = vmatpush.msra.mxu0 0.0
    %112 = vmatpush.msra.mxu0 0.0
    %113 = vmatpush.msra.mxu0 0.0
    %114 = vmatpush.msra.mxu0 %v93
    %115 = vmatmul.f32.gmra.mxu0 %v97
    %v116 = vpop.f32.mrf.mxu0
    %v117 = vadd.f32 0.0, %v116
    %118 = vdwg.mxu0
    %119 = vmatpush.msra.mxu0 0.0
    %120 = vmatpush.msra.mxu0 0.0
    %121 = vmatpush.msra.mxu0 0.0
    %122 = vmatpush.msra.mxu0 0.0
    %123 = vmatpush.msra.mxu0 0.0
    %124 = vmatpush.msra.mxu0 0.0
    %125 = vmatpush.msra.mxu0 0.0
    %126 = vmatpush.msra.mxu0 0.0
    %127 = vmatpush.msra.mxu0 0.0
    %128 = vmatpush.msra.mxu0 0.0
    %129 = vmatpush.msra.mxu0 0.0
    %130 = vmatpush.msra.mxu0 0.0
    %131 = vmatpush.msra.mxu0 0.0
    %132 = vmatpush.msra.mxu0 0.0
    %133 = vmatpush.msra.mxu0 0.0
    %134 = vmatpush.msra.mxu0 %v94
    %135 = vmatmul.f32.gmra.mxu0 %v97
    %v136 = vpop.f32.mrf.mxu0
    %v137 = vadd.f32 0.0, %v136
    %138 = vdwg.mxu0
    %v139 = vld [vmem:[#allocation9] ss:$8 sm:$0x3]
    %s140 = scalar_lea.vmem [#allocation9], 1
    %v141 = vld [vmem:[%s140] ss:$8 sm:$0x3]
    %v142 = vrot.slane %v117, 4
    %v143 = vadd.f32 %v117, %v142
    %v144 = vrot.slane %v143, 2
    %v145 = vadd.f32 %v143, %v144
    %v146 = vrot.slane %v145, 1
    %v147 = vadd.f32 %v145, %v146
    %v148 = vrot.slane %v137, 4
    %v149 = vadd.f32 %v137, %v148
    %v150 = vrot.slane %v149, 2
    %v151 = vadd.f32 %v149, %v150
    %v152 = vrot.slane %v151, 1
    %v153 = vadd.f32 %v151, %v152
    %v154 = vrcp.pop 8.0
    %v155 = vmul.f32 8.0, %v154
    %v156 = vsub.f32 1.0, %v155
    %v157 = vmul.f32 %v154, %v156
    %v158 = vadd.f32 %v154, %v157
    %vm159 = vweird.f32 %v154
    %v160 = vsel %vm159, %v154, %v158
    %v161 = vmul.f32 %v147, %v160
    %v162 = vmul.f32 %v153, %v160
    %v163 = vsub.f32 %v117, %v161
    %v164 = vsub.f32 %v137, %v162
    %v165 = vmul.f32 %v163, %v163
    %v166 = vmul.f32 %v164, %v164
    %v167 = vrot.slane %v165, 4
    %v168 = vadd.f32 %v165, %v167
    %v169 = vrot.slane %v168, 2
    %v170 = vadd.f32 %v168, %v169
    %v171 = vrot.slane %v170, 1
    %v172 = vadd.f32 %v170, %v171
    %v173 = vrot.slane %v166, 4
    %v174 = vadd.f32 %v166, %v173
    %v175 = vrot.slane %v174, 2
    %v176 = vadd.f32 %v174, %v175
    %v177 = vrot.slane %v176, 1
    %v178 = vadd.f32 %v176, %v177
    %v179 = vmul.f32 %v172, %v160
    %v180 = vmul.f32 %v178, %v160
    %v181 = vadd.f32 %v179, 1e-05
    %v182 = vadd.f32 %v180, 1e-05
    %v183 = vrsqrt.pop %v181
    %v184 = vmul.f32 %v183, %v181
    %v185 = vmul.f32 %v184, %v183
    %v186 = vmul.f32 0.5, %v185
    %v187 = vsub.f32 1.5, %v186
    %v188 = vmul.f32 %v183, %v187
    %vm189 = vweird.f32 %v181
    %vm190 = vweird.f32 %v183
    %vm191 = vmor %vm189, %vm190
    %v192 = vsel %vm191, %v183, %v188
    %v193 = vrsqrt.pop %v182
    %v194 = vmul.f32 %v193, %v182
    %v195 = vmul.f32 %v194, %v193
    %v196 = vmul.f32 0.5, %v195
    %v197 = vsub.f32 1.5, %v196
    %v198 = vmul.f32 %v193, %v197
    %vm199 = vweird.f32 %v182
    %vm200 = vweird.f32 %v193
    %vm201 = vmor %vm199, %vm200
    %v202 = vsel %vm201, %v193, %v198
    %v205 = vrot.slane %v202, 7
    %vm206 = vcmask 1040384
    %v207 = vsel %vm206, %v192, %v205
    %v209 = vmul.f32 %v139, %v207
    %v211 = vperm.slane %v209, 0
    %v212 = vperm.slane %v209, 1
    %v215 = vmul.f32 %v161, %v211
    %v216 = vmul.f32 %v162, %v212
    %v219 = vrot.slane %v216, 7
    %v220 = vsel %vm206, %v215, %v219
    %v222 = vsub.f32 %v141, %v220
    %v223 = vmul.f32 %v117, %v211
    %v224 = vmul.f32 %v137, %v212
    %v226 = vperm.slane %v222, 0
    %v227 = vperm.slane %v222, 1
    %v230 = vadd.f32 %v223, %v226
    %v231 = vadd.f32 %v224, %v227
    %v232 = vmax.f32 %v230, 0.0
    %v233 = vmax.f32 %v231, 0.0
    %v234 = vpack.c.bf16 %v232, %v232
    %v235 = vpack.c.bf16 %v233, %v233
    %v236 = vld [vmem:[#allocation6] sm:$0xff]
    %v237 = vld [vmem:[#allocation6 + $0x8] sm:$0xff]
    %v238 = vld [vmem:[#allocation6 + $0x10] sm:$0xff]
    %v239 = vld [vmem:[#allocation6 + $0x18] sm:$0xff]
    %v240 = vld [vmem:[#allocation6 + $0x20] sm:$0xff]
    %v241 = vld [vmem:[#allocation6 + $0x28] sm:$0xff]
    %v242 = vld [vmem:[#allocation6 + $0x30] sm:$0xff]
    %v243 = vld [vmem:[#allocation6 + $0x38] sm:$0xff]
    %v244 = vld [vmem:[#allocation6 + $0x40] sm:$0xff]
    %v245 = vld [vmem:[#allocation6 + $0x48] sm:$0xff]
    %v246 = vld [vmem:[#allocation6 + $0x50] sm:$0xff]
    %v247 = vld [vmem:[#allocation6 + $0x58] sm:$0xff]
    %v248 = vld [vmem:[#allocation6 + $0x60] sm:$0xff]
    %v249 = vld [vmem:[#allocation6 + $0x68] sm:$0xff]
    %v250 = vld [vmem:[#allocation6 + $0x70] sm:$0xff]
    %v251 = vld [vmem:[#allocation6 + $0x78] sm:$0xff]
    %v252 = vld [vmem:[#allocation6 + $0x80] sm:$0xff]
    %v253 = vld [vmem:[#allocation6 + $0x88] sm:$0xff]
    %v254 = vld [vmem:[#allocation6 + $0x90] sm:$0xff]
    %v255 = vld [vmem:[#allocation6 + $0x98] sm:$0xff]
    %v256 = vld [vmem:[#allocation6 + $0xa0] sm:$0xff]
    %v257 = vld [vmem:[#allocation6 + $0xa8] sm:$0xff]
    %v258 = vld [vmem:[#allocation6 + $0xb0] sm:$0xff]
    %v259 = vld [vmem:[#allocation6 + $0xb8] sm:$0xff]
    %v260 = vld [vmem:[#allocation6 + $0xc0] sm:$0xff]
    %v261 = vld [vmem:[#allocation6 + $0xc8] sm:$0xff]
    %v262 = vld [vmem:[#allocation6 + $0xd0] sm:$0xff]
    %v263 = vld [vmem:[#allocation6 + $0xd8] sm:$0xff]
    %v264 = vld [vmem:[#allocation6 + $0xe0] sm:$0xff]
    %v265 = vld [vmem:[#allocation6 + $0xe8] sm:$0xff]
    %v266 = vld [vmem:[#allocation6 + $0xf0] sm:$0xff]
    %v267 = vld [vmem:[#allocation6 + $0xf8] sm:$0xff]
    %v300 = vunpack.c.l.b16 %v236
    %v301 = vunpack.c.h.b16 %v236
    %v302 = vunpack.c.l.b16 %v237
    %v303 = vunpack.c.h.b16 %v237
    %v304 = vunpack.c.l.b16 %v238
    %v305 = vunpack.c.h.b16 %v238
    %v306 = vunpack.c.l.b16 %v239
    %v307 = vunpack.c.h.b16 %v239
    %v308 = vunpack.c.l.b16 %v240
    %v309 = vunpack.c.h.b16 %v240
    %v310 = vunpack.c.l.b16 %v241
    %v311 = vunpack.c.h.b16 %v241
    %v312 = vunpack.c.l.b16 %v242
    %v313 = vunpack.c.h.b16 %v242
    %v314 = vunpack.c.l.b16 %v243
    %v315 = vunpack.c.h.b16 %v243
    %v316 = vunpack.c.l.b16 %v244
    %v317 = vunpack.c.h.b16 %v244
    %v318 = vunpack.c.l.b16 %v245
    %v319 = vunpack.c.h.b16 %v245
    %v320 = vunpack.c.l.b16 %v246
    %v321 = vunpack.c.h.b16 %v246
    %v322 = vunpack.c.l.b16 %v247
    %v323 = vunpack.c.h.b16 %v247
    %v324 = vunpack.c.l.b16 %v248
    %v325 = vunpack.c.h.b16 %v248
    %v326 = vunpack.c.l.b16 %v249
    %v327 = vunpack.c.h.b16 %v249
    %v328 = vunpack.c.l.b16 %v250
    %v329 = vunpack.c.h.b16 %v250
    %v330 = vunpack.c.l.b16 %v251
    %v331 = vunpack.c.h.b16 %v251
    %v332 = vunpack.c.l.b16 %v252
    %v333 = vunpack.c.h.b16 %v252
    %v334 = vunpack.c.l.b16 %v253
    %v335 = vunpack.c.h.b16 %v253
    %v336 = vunpack.c.l.b16 %v254
    %v337 = vunpack.c.h.b16 %v254
    %v338 = vunpack.c.l.b16 %v255
    %v339 = vunpack.c.h.b16 %v255
    %v340 = vunpack.c.l.b16 %v256
    %v341 = vunpack.c.h.b16 %v256
    %v342 = vunpack.c.l.b16 %v257
    %v343 = vunpack.c.h.b16 %v257
    %v344 = vunpack.c.l.b16 %v258
    %v345 = vunpack.c.h.b16 %v258
    %v346 = vunpack.c.l.b16 %v259
    %v347 = vunpack.c.h.b16 %v259
    %v348 = vunpack.c.l.b16 %v260
    %v349 = vunpack.c.h.b16 %v260
    %v350 = vunpack.c.l.b16 %v261
    %v351 = vunpack.c.h.b16 %v261
    %v352 = vunpack.c.l.b16 %v262
    %v353 = vunpack.c.h.b16 %v262
    %v354 = vunpack.c.l.b16 %v263
    %v355 = vunpack.c.h.b16 %v263
    %v356 = vunpack.c.l.b16 %v264
    %v357 = vunpack.c.h.b16 %v264
    %v358 = vunpack.c.l.b16 %v265
    %v359 = vunpack.c.h.b16 %v265
    %v360 = vunpack.c.l.b16 %v266
    %v361 = vunpack.c.h.b16 %v266
    %v362 = vunpack.c.l.b16 %v267
    %v363 = vunpack.c.h.b16 %v267
    %v364 = vpack.c.b16 %v302, %v300
    %v365 = vpack.c.b16 %v303, %v301
    %v366 = vpack.c.b16 %v306, %v304
    %v367 = vpack.c.b16 %v307, %v305
    %v368 = vpack.c.b16 %v310, %v308
    %v369 = vpack.c.b16 %v311, %v309
    %v370 = vpack.c.b16 %v314, %v312
    %v371 = vpack.c.b16 %v315, %v313
    %v372 = vpack.c.b16 %v318, %v316
    %v373 = vpack.c.b16 %v319, %v317
    %v374 = vpack.c.b16 %v322, %v320
    %v375 = vpack.c.b16 %v323, %v321
    %v376 = vpack.c.b16 %v326, %v324
    %v377 = vpack.c.b16 %v327, %v325
    %v378 = vpack.c.b16 %v330, %v328
    %v379 = vpack.c.b16 %v331, %v329
    %v380 = vpack.c.b16 %v334, %v332
    %v381 = vpack.c.b16 %v335, %v333
    %v382 = vpack.c.b16 %v338, %v336
    %v383 = vpack.c.b16 %v339, %v337
    %v384 = vpack.c.b16 %v342, %v340
    %v385 = vpack.c.b16 %v343, %v341
    %v386 = vpack.c.b16 %v346, %v344
    %v387 = vpack.c.b16 %v347, %v345
    %v388 = vpack.c.b16 %v350, %v348
    %v389 = vpack.c.b16 %v351, %v349
    %v390 = vpack.c.b16 %v354, %v352
    %v391 = vpack.c.b16 %v355, %v353
    %v392 = vpack.c.b16 %v358, %v356
    %v393 = vpack.c.b16 %v359, %v357
    %v394 = vpack.c.b16 %v362, %v360
    %v395 = vpack.c.b16 %v363, %v361
    %428 = vmatpush.bf16.msra.mxu0 %v378
    %429 = vmatpush.bf16.msra.mxu0 %v376
    %430 = vmatpush.bf16.msra.mxu0 %v374
    %431 = vmatpush.bf16.msra.mxu0 %v372
    %432 = vmatpush.bf16.msra.mxu0 %v370
    %433 = vmatpush.bf16.msra.mxu0 %v368
    %434 = vmatpush.bf16.msra.mxu0 %v366
    %435 = vmatpush.bf16.msra.mxu0 %v364
    %436 = vmatmul.bf16.gmra.mxu0 %v234
    %v437 = vpop.f32.mrf.mxu0
    %v438 = vadd.f32 0.0, %v437
    %v439 = vpop.f32.mrf.mxu0
    %440 = vdwg.mxu0
    %441 = vmatpush.bf16.msra.mxu0 %v394
    %442 = vmatpush.bf16.msra.mxu0 %v392
    %443 = vmatpush.bf16.msra.mxu0 %v390
    %444 = vmatpush.bf16.msra.mxu0 %v388
    %445 = vmatpush.bf16.msra.mxu0 %v386
    %446 = vmatpush.bf16.msra.mxu0 %v384
    %447 = vmatpush.bf16.msra.mxu0 %v382
    %448 = vmatpush.bf16.msra.mxu0 %v380
    %449 = vmatmul.bf16.gmra.mxu0 %v235
    %v450 = vpop.f32.mrf.mxu0
    %v451 = vadd.f32 %v438, %v450
    %v452 = vpop.f32.mrf.mxu0
    %453 = vdwg.mxu0
    %454 = vmatpush.bf16.msra.mxu0 %v379
    %455 = vmatpush.bf16.msra.mxu0 %v377
    %456 = vmatpush.bf16.msra.mxu0 %v375
    %457 = vmatpush.bf16.msra.mxu0 %v373
    %458 = vmatpush.bf16.msra.mxu0 %v371
    %459 = vmatpush.bf16.msra.mxu0 %v369
    %460 = vmatpush.bf16.msra.mxu0 %v367
    %461 = vmatpush.bf16.msra.mxu0 %v365
    %462 = vmatmul.bf16.gmra.mxu0 %v234
    %v463 = vpop.f32.mrf.mxu0
    %v464 = vadd.f32 0.0, %v463
    %v465 = vpop.f32.mrf.mxu0
    %466 = vdwg.mxu0
    %467 = vmatpush.bf16.msra.mxu0 %v395
    %468 = vmatpush.bf16.msra.mxu0 %v393
    %469 = vmatpush.bf16.msra.mxu0 %v391
    %470 = vmatpush.bf16.msra.mxu0 %v389
    %471 = vmatpush.bf16.msra.mxu0 %v387
    %472 = vmatpush.bf16.msra.mxu0 %v385
    %473 = vmatpush.bf16.msra.mxu0 %v383
    %474 = vmatpush.bf16.msra.mxu0 %v381
    %475 = vmatmul.bf16.gmra.mxu0 %v235
    %v476 = vpop.f32.mrf.mxu0
    %v477 = vadd.f32 %v464, %v476
    %v478 = vpop.f32.mrf.mxu0
    %479 = vdwg.mxu0
    %s480 = scalar_lea.vmem [#allocation9], 2
    %v481 = vld [vmem:[%s480] ss:$8 sm:$0x3]
    %s482 = scalar_lea.vmem [#allocation9], 3
    %v483 = vld [vmem:[%s482] ss:$8 sm:$0x3]
    %v484 = vrot.slane %v451, 4
    %v485 = vadd.f32 %v451, %v484
    %v486 = vrot.slane %v485, 2
    %v487 = vadd.f32 %v485, %v486
    %v488 = vrot.slane %v487, 1
    %v489 = vadd.f32 %v487, %v488
    %v490 = vrot.slane %v477, 4
    %v491 = vadd.f32 %v477, %v490
    %v492 = vrot.slane %v491, 2
    %v493 = vadd.f32 %v491, %v492
    %v494 = vrot.slane %v493, 1
    %v495 = vadd.f32 %v493, %v494
    %v496 = vmul.f32 %v489, %v160
    %v497 = vmul.f32 %v495, %v160
    %v498 = vsub.f32 %v451, %v496
    %v499 = vsub.f32 %v477, %v497
    %v500 = vmul.f32 %v498, %v498
    %v501 = vmul.f32 %v499, %v499
    %v502 = vrot.slane %v500, 4
    %v503 = vadd.f32 %v500, %v502
    %v504 = vrot.slane %v503, 2
    %v505 = vadd.f32 %v503, %v504
    %v506 = vrot.slane %v505, 1
    %v507 = vadd.f32 %v505, %v506
    %v508 = vrot.slane %v501, 4
    %v509 = vadd.f32 %v501, %v508
    %v510 = vrot.slane %v509, 2
    %v511 = vadd.f32 %v509, %v510
    %v512 = vrot.slane %v511, 1
    %v513 = vadd.f32 %v511, %v512
    %v514 = vmul.f32 %v507, %v160
    %v515 = vmul.f32 %v513, %v160
    %v516 = vadd.f32 %v514, 1e-05
    %v517 = vadd.f32 %v515, 1e-05
    %v518 = vrsqrt.pop %v516
    %v519 = vmul.f32 %v518, %v516
    %v520 = vmul.f32 %v519, %v518
    %v521 = vmul.f32 0.5, %v520
    %v522 = vsub.f32 1.5, %v521
    %v523 = vmul.f32 %v518, %v522
    %vm524 = vweird.f32 %v516
    %vm525 = vweird.f32 %v518
    %vm526 = vmor %vm524, %vm525
    %v527 = vsel %vm526, %v518, %v523
    %v528 = vrsqrt.pop %v517
    %v529 = vmul.f32 %v528, %v517
    %v530 = vmul.f32 %v529, %v528
    %v531 = vmul.f32 0.5, %v530
    %v532 = vsub.f32 1.5, %v531
    %v533 = vmul.f32 %v528, %v532
    %vm534 = vweird.f32 %v517
    %vm535 = vweird.f32 %v528
    %vm536 = vmor %vm534, %vm535
    %v537 = vsel %vm536, %v528, %v533
    %v540 = vrot.slane %v537, 7
    %v541 = vsel %vm206, %v527, %v540
    %v543 = vmul.f32 %v481, %v541
    %v545 = vperm.slane %v543, 0
    %v546 = vperm.slane %v543, 1
    %v549 = vmul.f32 %v496, %v545
    %v550 = vmul.f32 %v497, %v546
    %v553 = vrot.slane %v550, 7
    %v554 = vsel %vm206, %v549, %v553
    %v556 = vsub.f32 %v483, %v554
    %v557 = vmul.f32 %v451, %v545
    %v558 = vmul.f32 %v477, %v546
    %v560 = vperm.slane %v556, 0
    %v561 = vperm.slane %v556, 1
    %v564 = vadd.f32 %v557, %v560
    %v565 = vadd.f32 %v558, %v561
    %v566 = vmax.f32 %v564, 0.0
    %v567 = vmax.f32 %v565, 0.0
    %v568 = vpack.c.bf16 %v566, %v566
    %v569 = vpack.c.bf16 %v567, %v567
    %v570 = vld [vmem:[#allocation7] sm:$0xff]
    %v571 = vld [vmem:[#allocation7 + $0x8] sm:$0xff]
    %v572 = vld [vmem:[#allocation7 + $0x10] sm:$0xff]
    %v573 = vld [vmem:[#allocation7 + $0x18] sm:$0xff]
    %v574 = vld [vmem:[#allocation7 + $0x20] sm:$0xff]
    %v575 = vld [vmem:[#allocation7 + $0x28] sm:$0xff]
    %v576 = vld [vmem:[#allocation7 + $0x30] sm:$0xff]
    %v577 = vld [vmem:[#allocation7 + $0x38] sm:$0xff]
    %v578 = vld [vmem:[#allocation7 + $0x40] sm:$0xff]
    %v579 = vld [vmem:[#allocation7 + $0x48] sm:$0xff]
    %v580 = vld [vmem:[#allocation7 + $0x50] sm:$0xff]
    %v581 = vld [vmem:[#allocation7 + $0x58] sm:$0xff]
    %v582 = vld [vmem:[#allocation7 + $0x60] sm:$0xff]
    %v583 = vld [vmem:[#allocation7 + $0x68] sm:$0xff]
    %v584 = vld [vmem:[#allocation7 + $0x70] sm:$0xff]
    %v585 = vld [vmem:[#allocation7 + $0x78] sm:$0xff]
    %v586 = vld [vmem:[#allocation7 + $0x80] sm:$0xff]
    %v587 = vld [vmem:[#allocation7 + $0x88] sm:$0xff]
    %v588 = vld [vmem:[#allocation7 + $0x90] sm:$0xff]
    %v589 = vld [vmem:[#allocation7 + $0x98] sm:$0xff]
    %v590 = vld [vmem:[#allocation7 + $0xa0] sm:$0xff]
    %v591 = vld [vmem:[#allocation7 + $0xa8] sm:$0xff]
    %v592 = vld [vmem:[#allocation7 + $0xb0] sm:$0xff]
    %v593 = vld [vmem:[#allocation7 + $0xb8] sm:$0xff]
    %v594 = vld [vmem:[#allocation7 + $0xc0] sm:$0xff]
    %v595 = vld [vmem:[#allocation7 + $0xc8] sm:$0xff]
    %v596 = vld [vmem:[#allocation7 + $0xd0] sm:$0xff]
    %v597 = vld [vmem:[#allocation7 + $0xd8] sm:$0xff]
    %v598 = vld [vmem:[#allocation7 + $0xe0] sm:$0xff]
    %v599 = vld [vmem:[#allocation7 + $0xe8] sm:$0xff]
    %v600 = vld [vmem:[#allocation7 + $0xf0] sm:$0xff]
    %v601 = vld [vmem:[#allocation7 + $0xf8] sm:$0xff]
    %v634 = vunpack.c.l.b16 %v570
    %v635 = vunpack.c.h.b16 %v570
    %v636 = vunpack.c.l.b16 %v571
    %v637 = vunpack.c.h.b16 %v571
    %v638 = vunpack.c.l.b16 %v572
    %v639 = vunpack.c.h.b16 %v572
    %v640 = vunpack.c.l.b16 %v573
    %v641 = vunpack.c.h.b16 %v573
    %v642 = vunpack.c.l.b16 %v574
    %v643 = vunpack.c.h.b16 %v574
    %v644 = vunpack.c.l.b16 %v575
    %v645 = vunpack.c.h.b16 %v575
    %v646 = vunpack.c.l.b16 %v576
    %v647 = vunpack.c.h.b16 %v576
    %v648 = vunpack.c.l.b16 %v577
    %v649 = vunpack.c.h.b16 %v577
    %v650 = vunpack.c.l.b16 %v578
    %v651 = vunpack.c.h.b16 %v578
    %v652 = vunpack.c.l.b16 %v579
    %v653 = vunpack.c.h.b16 %v579
    %v654 = vunpack.c.l.b16 %v580
    %v655 = vunpack.c.h.b16 %v580
    %v656 = vunpack.c.l.b16 %v581
    %v657 = vunpack.c.h.b16 %v581
    %v658 = vunpack.c.l.b16 %v582
    %v659 = vunpack.c.h.b16 %v582
    %v660 = vunpack.c.l.b16 %v583
    %v661 = vunpack.c.h.b16 %v583
    %v662 = vunpack.c.l.b16 %v584
    %v663 = vunpack.c.h.b16 %v584
    %v664 = vunpack.c.l.b16 %v585
    %v665 = vunpack.c.h.b16 %v585
    %v666 = vunpack.c.l.b16 %v586
    %v667 = vunpack.c.h.b16 %v586
    %v668 = vunpack.c.l.b16 %v587
    %v669 = vunpack.c.h.b16 %v587
    %v670 = vunpack.c.l.b16 %v588
    %v671 = vunpack.c.h.b16 %v588
    %v672 = vunpack.c.l.b16 %v589
    %v673 = vunpack.c.h.b16 %v589
    %v674 = vunpack.c.l.b16 %v590
    %v675 = vunpack.c.h.b16 %v590
    %v676 = vunpack.c.l.b16 %v591
    %v677 = vunpack.c.h.b16 %v591
    %v678 = vunpack.c.l.b16 %v592
    %v679 = vunpack.c.h.b16 %v592
    %v680 = vunpack.c.l.b16 %v593
    %v681 = vunpack.c.h.b16 %v593
    %v682 = vunpack.c.l.b16 %v594
    %v683 = vunpack.c.h.b16 %v594
    %v684 = vunpack.c.l.b16 %v595
    %v685 = vunpack.c.h.b16 %v595
    %v686 = vunpack.c.l.b16 %v596
    %v687 = vunpack.c.h.b16 %v596
    %v688 = vunpack.c.l.b16 %v597
    %v689 = vunpack.c.h.b16 %v597
    %v690 = vunpack.c.l.b16 %v598
    %v691 = vunpack.c.h.b16 %v598
    %v692 = vunpack.c.l.b16 %v599
    %v693 = vunpack.c.h.b16 %v599
    %v694 = vunpack.c.l.b16 %v600
    %v695 = vunpack.c.h.b16 %v600
    %v696 = vunpack.c.l.b16 %v601
    %v697 = vunpack.c.h.b16 %v601
    %v698 = vpack.c.b16 %v636, %v634
    %v699 = vpack.c.b16 %v637, %v635
    %v700 = vpack.c.b16 %v640, %v638
    %v701 = vpack.c.b16 %v641, %v639
    %v702 = vpack.c.b16 %v644, %v642
    %v703 = vpack.c.b16 %v645, %v643
    %v704 = vpack.c.b16 %v648, %v646
    %v705 = vpack.c.b16 %v649, %v647
    %v706 = vpack.c.b16 %v652, %v650
    %v707 = vpack.c.b16 %v653, %v651
    %v708 = vpack.c.b16 %v656, %v654
    %v709 = vpack.c.b16 %v657, %v655
    %v710 = vpack.c.b16 %v660, %v658
    %v711 = vpack.c.b16 %v661, %v659
    %v712 = vpack.c.b16 %v664, %v662
    %v713 = vpack.c.b16 %v665, %v663
    %v714 = vpack.c.b16 %v668, %v666
    %v715 = vpack.c.b16 %v669, %v667
    %v716 = vpack.c.b16 %v672, %v670
    %v717 = vpack.c.b16 %v673, %v671
    %v718 = vpack.c.b16 %v676, %v674
    %v719 = vpack.c.b16 %v677, %v675
    %v720 = vpack.c.b16 %v680, %v678
    %v721 = vpack.c.b16 %v681, %v679
    %v722 = vpack.c.b16 %v684, %v682
    %v723 = vpack.c.b16 %v685, %v683
    %v724 = vpack.c.b16 %v688, %v686
    %v725 = vpack.c.b16 %v689, %v687
    %v726 = vpack.c.b16 %v692, %v690
    %v727 = vpack.c.b16 %v693, %v691
    %v728 = vpack.c.b16 %v696, %v694
    %v729 = vpack.c.b16 %v697, %v695
    %762 = vmatpush.bf16.msra.mxu0 %v712
    %763 = vmatpush.bf16.msra.mxu0 %v710
    %764 = vmatpush.bf16.msra.mxu0 %v708
    %765 = vmatpush.bf16.msra.mxu0 %v706
    %766 = vmatpush.bf16.msra.mxu0 %v704
    %767 = vmatpush.bf16.msra.mxu0 %v702
    %768 = vmatpush.bf16.msra.mxu0 %v700
    %769 = vmatpush.bf16.msra.mxu0 %v698
    %770 = vmatmul.bf16.gmra.mxu0 %v568
    %v771 = vpop.f32.mrf.mxu0
    %v772 = vadd.f32 0.0, %v771
    %v773 = vpop.f32.mrf.mxu0
    %774 = vdwg.mxu0
    %775 = vmatpush.bf16.msra.mxu0 %v728
    %776 = vmatpush.bf16.msra.mxu0 %v726
    %777 = vmatpush.bf16.msra.mxu0 %v724
    %778 = vmatpush.bf16.msra.mxu0 %v722
    %779 = vmatpush.bf16.msra.mxu0 %v720
    %780 = vmatpush.bf16.msra.mxu0 %v718
    %781 = vmatpush.bf16.msra.mxu0 %v716
    %782 = vmatpush.bf16.msra.mxu0 %v714
    %783 = vmatmul.bf16.gmra.mxu0 %v569
    %v784 = vpop.f32.mrf.mxu0
    %v785 = vadd.f32 %v772, %v784
    %v786 = vpop.f32.mrf.mxu0
    %787 = vdwg.mxu0
    %788 = vmatpush.bf16.msra.mxu0 %v713
    %789 = vmatpush.bf16.msra.mxu0 %v711
    %790 = vmatpush.bf16.msra.mxu0 %v709
    %791 = vmatpush.bf16.msra.mxu0 %v707
    %792 = vmatpush.bf16.msra.mxu0 %v705
    %793 = vmatpush.bf16.msra.mxu0 %v703
    %794 = vmatpush.bf16.msra.mxu0 %v701
    %795 = vmatpush.bf16.msra.mxu0 %v699
    %796 = vmatmul.bf16.gmra.mxu0 %v568
    %v797 = vpop.f32.mrf.mxu0
    %v798 = vadd.f32 0.0, %v797
    %v799 = vpop.f32.mrf.mxu0
    %800 = vdwg.mxu0
    %801 = vmatpush.bf16.msra.mxu0 %v729
    %802 = vmatpush.bf16.msra.mxu0 %v727
    %803 = vmatpush.bf16.msra.mxu0 %v725
    %804 = vmatpush.bf16.msra.mxu0 %v723
    %805 = vmatpush.bf16.msra.mxu0 %v721
    %806 = vmatpush.bf16.msra.mxu0 %v719
    %807 = vmatpush.bf16.msra.mxu0 %v717
    %808 = vmatpush.bf16.msra.mxu0 %v715
    %809 = vmatmul.bf16.gmra.mxu0 %v569
    %v810 = vpop.f32.mrf.mxu0
    %v811 = vadd.f32 %v798, %v810
    %v812 = vpop.f32.mrf.mxu0
    %813 = vdwg.mxu0
    %s814 = scalar_lea.vmem [#allocation9], 4
    %v815 = vld [vmem:[%s814] ss:$8 sm:$0x3]
    %s816 = scalar_lea.vmem [#allocation9], 5
    %v817 = vld [vmem:[%s816] ss:$8 sm:$0x3]
    %v818 = vrot.slane %v785, 4
    %v819 = vadd.f32 %v785, %v818
    %v820 = vrot.slane %v819, 2
    %v821 = vadd.f32 %v819, %v820
    %v822 = vrot.slane %v821, 1
    %v823 = vadd.f32 %v821, %v822
    %v824 = vrot.slane %v811, 4
    %v825 = vadd.f32 %v811, %v824
    %v826 = vrot.slane %v825, 2
    %v827 = vadd.f32 %v825, %v826
    %v828 = vrot.slane %v827, 1
    %v829 = vadd.f32 %v827, %v828
    %v830 = vmul.f32 %v823, %v160
    %v831 = vmul.f32 %v829, %v160
    %v832 = vsub.f32 %v785, %v830
    %v833 = vsub.f32 %v811, %v831
    %v834 = vmul.f32 %v832, %v832
    %v835 = vmul.f32 %v833, %v833
    %v836 = vrot.slane %v834, 4
    %v837 = vadd.f32 %v834, %v836
    %v838 = vrot.slane %v837, 2
    %v839 = vadd.f32 %v837, %v838
    %v840 = vrot.slane %v839, 1
    %v841 = vadd.f32 %v839, %v840
    %v842 = vrot.slane %v835, 4
    %v843 = vadd.f32 %v835, %v842
    %v844 = vrot.slane %v843, 2
    %v845 = vadd.f32 %v843, %v844
    %v846 = vrot.slane %v845, 1
    %v847 = vadd.f32 %v845, %v846
    %v848 = vmul.f32 %v841, %v160
    %v849 = vmul.f32 %v847, %v160
    %v850 = vadd.f32 %v848, 1e-05
    %v851 = vadd.f32 %v849, 1e-05
    %v852 = vrsqrt.pop %v850
    %v853 = vmul.f32 %v852, %v850
    %v854 = vmul.f32 %v853, %v852
    %v855 = vmul.f32 0.5, %v854
    %v856 = vsub.f32 1.5, %v855
    %v857 = vmul.f32 %v852, %v856
    %vm858 = vweird.f32 %v850
    %vm859 = vweird.f32 %v852
    %vm860 = vmor %vm858, %vm859
    %v861 = vsel %vm860, %v852, %v857
    %v862 = vrsqrt.pop %v851
    %v863 = vmul.f32 %v862, %v851
    %v864 = vmul.f32 %v863, %v862
    %v865 = vmul.f32 0.5, %v864
    %v866 = vsub.f32 1.5, %v865
    %v867 = vmul.f32 %v862, %v866
    %vm868 = vweird.f32 %v851
    %vm869 = vweird.f32 %v862
    %vm870 = vmor %vm868, %vm869
    %v871 = vsel %vm870, %v862, %v867
    %v874 = vrot.slane %v871, 7
    %v875 = vsel %vm206, %v861, %v874
    %v877 = vmul.f32 %v815, %v875
    %v879 = vperm.slane %v877, 0
    %v880 = vperm.slane %v877, 1
    %v883 = vmul.f32 %v830, %v879
    %v884 = vmul.f32 %v831, %v880
    %v887 = vrot.slane %v884, 7
    %v888 = vsel %vm206, %v883, %v887
    %v890 = vsub.f32 %v817, %v888
    %v891 = vmul.f32 %v785, %v879
    %v892 = vmul.f32 %v811, %v880
    %v894 = vperm.slane %v890, 0
    %v895 = vperm.slane %v890, 1
    %v898 = vadd.f32 %v891, %v894
    %v899 = vadd.f32 %v892, %v895
    %v900 = vmax.f32 %v898, 0.0
    %v901 = vmax.f32 %v899, 0.0
    %s902 = scalar_lea.vmem [#allocation9], 6
    %v903 = vld [vmem:[%s902] ss:$8 sm:$0x3]
    %s904 = scalar_lea.vmem [#allocation9], 7
    %v905 = vld [vmem:[%s904] ss:$8 sm:$0x3]
    %v907 = vperm.slane %v903, 0
    %v908 = vperm.slane %v903, 1
    %v911 = vmul.f32 %v900, %v907
    %v912 = vmul.f32 %v901, %v908
    %v913 = vadd.f32 %v911, %v912
    %914 = vadd.xlane.f32.xlu0 %v913
    %v915 = vpop.xlane.xlu0 %914
    %v917 = vperm.slane %v905, 0
    %v919 = vadd.f32 %v915, %v917
    %vm920 = vcmask 7168
    %921 = vst.msk [vmem:[%s5] sm:$0xff] %vm920, %v919
    // Predicated region
    $region42: #{net_forward.1} parent=1 // pred_check
      _
    $region43: #{net_forward.1} parent=1 // pred_check_branch
      %923 = sbr.rel (0) target = $region45
    $region44: #{net_forward.1} parent=1 // pred_region
      _
    $region45: #{net_forward.1} parent=1 // pred_fallthru
      _
    // Predicated region
    $region46: #{net_forward.1} parent=1 // pred_check
      _
    $region47: #{net_forward.1} parent=1 // pred_check_branch
      %925 = sbr.rel (0) target = $region49
    $region48: #{net_forward.1} parent=1 // pred_region
      _
    $region49: #{net_forward.1} parent=1 // pred_fallthru
      _
    %926 = vsyncpa [#allocation3], 1
    %927 = vsyncpa [#allocation5], 1
    %928 = vsyncpa [#allocation8], 1

</llo_original>
